<compile_context>
chip_gen: v7x
topology: tpu7x:2x2x1
jax: 0.10.0
libtpu: 0.0.40
codegen_flags: <defaults>
</compile_context>

<pallas_src>
import jax
import jax.numpy as jnp
from jax.experimental import pallas as pl
from jax.experimental.pallas import tpu as pltpu


# ----------------------------------------------------------------------------
# helpers
# ----------------------------------------------------------------------------
def _round_up(a, m):
    return ((a + m - 1) // m) * m


def _cdiv(a, b):
    return -(-a // b)


def _choose_tile(n, max_tile_n, min_grid_steps):
    """Pick a lane-dense batch tile (multiple of 128) and padded batch size.

    Guarantees:  128 <= tn <= max_tile_n (rounded to 128), and the grid has at
    least min(min_grid_steps, n/128) steps so v7x can shard across both
    TensorCores and the BlockSpec pipeline can overlap DMA with compute.
    """
    lane = 128
    max_tile_n = max(lane, (int(max_tile_n) // lane) * lane)   # robust: 128-align
    min_grid_steps = max(1, int(min_grid_steps))

    n128 = _round_up(max(int(n), 1), lane)
    lane_blocks = n128 // lane
    max_blocks_per_step = max_tile_n // lane

    steps = max(_cdiv(lane_blocks, max_blocks_per_step), min_grid_steps)
    steps = min(steps, lane_blocks)
    tn = _cdiv(lane_blocks, steps) * lane          # multiple of 128, <= max_tile_n
    padded_n = _round_up(n128, tn)
    return tn, padded_n


# ----------------------------------------------------------------------------
# parameter packing
# ----------------------------------------------------------------------------
def pack_params(params):
    """Pack PyTorch-layout params (W:(out,in), b:(out,)) into one (rows, C) array.

    rows = max(hidden, output). Column layout:
      [0, in_f)                        W1   (rows, in_f)
      [in_f, in_f+1)                   b1   (rows, 1)
      [in_f+1, in_f+1+rows)            W2   (rows, rows)
      [in_f+1+rows, in_f+2+rows)       b2   (rows, 1)
      [in_f+2+rows, in_f+2+2*rows)     W3   (rows, rows)
      [in_f+2+2*rows, in_f+3+2*rows)   b3   (rows, 1)
    All padding rows/cols are zero, so padded hidden units stay exactly 0.
    """
    w1, b1, w2, b2, w3, b3 = params
    hid, in_f = w1.shape
    out_f = w3.shape[0]
    rows = max(hid, out_f)

    def pad_rows(a):
        a = a.astype(jnp.float32)
        return jnp.pad(a, ((0, rows - a.shape[0]), (0, 0)))

    col = lambda b: b.reshape(-1, 1).astype(jnp.float32)

    w1p = pad_rows(w1)                                                   # (rows, in_f)
    b1p = pad_rows(col(b1))                                              # (rows, 1)
    w2p = jnp.pad(w2.astype(jnp.float32), ((0, rows - hid), (0, rows - hid)))
    b2p = pad_rows(col(b2))
    w3p = jnp.pad(w3.astype(jnp.float32), ((0, rows - out_f), (0, rows - hid)))
    b3p = pad_rows(col(b3))
    return jnp.concatenate([w1p, b1p, w2p, b2p, w3p, b3p], axis=1)


# ----------------------------------------------------------------------------
# kernel
# ----------------------------------------------------------------------------
def _make_blob_kernel(in_f, rows, out_f):
    """Fused MLP kernel for fixed layer sizes (feature-major activations)."""
    c_w1 = 0
    c_b1 = in_f
    c_w2 = in_f + 1
    c_b2 = in_f + 1 + rows
    c_w3 = in_f + 2 + rows
    c_b3 = in_f + 2 + 2 * rows

    def kernel(p_ref, x_ref, o_ref):
        p = p_ref[...]            # (rows, C)   -- tiny, VMEM-resident (constant index_map)
        x = x_ref[...]            # (in_f, TILE_N), batch on lanes

        def mac(w_col0, n_in, h_in, b_col):
            # out[o, n] = sum_k W[o, k] * h_in[k, n] + b[o]
            # (rows,1) x (1,N) broadcast multiply-adds -> pure VPU, no MXU.
            acc = p[:, w_col0:w_col0 + 1] * h_in[0:1, :]
            for k in range(1, n_in):
                acc = acc + p[:, w_col0 + k:w_col0 + k + 1] * h_in[k:k + 1, :]
            return acc + p[:, b_col:b_col + 1]

        h1 = jnp.maximum(mac(c_w1, in_f, x, c_b1), 0.0)     # (rows, TILE_N)
        h2 = jnp.maximum(mac(c_w2, rows, h1, c_b2), 0.0)    # (rows, TILE_N)
        logits = mac(c_w3, rows, h2, c_b3)                  # (rows, TILE_N)
        # Sublane-masked but lane-dense store; rows >= out_f hold exact zeros.
        o_ref[...] = logits[0:out_f, :].astype(o_ref.dtype)

    return kernel


# ----------------------------------------------------------------------------
# forward passes
# ----------------------------------------------------------------------------
def blob_model_forward_fm(x_fm, params, *, max_tile_n=65536, min_grid_steps=4):
    """Zero-copy feature-major forward.

    x_fm: (in_features, N) float array.  Returns (out_features, N).
    No wrapper-side transposes; the only wrapper op is a column pad when N is
    not a multiple of the chosen tile.
    """
    w1, b1, w2, b2, w3, b3 = params
    in_f_x, n = x_fm.shape
    hid, in_f = w1.shape
    out_f = w3.shape[0]
    assert in_f_x == in_f, "x feature dim does not match W1"
    rows = max(hid, out_f)

    packed = pack_params(params)                       # (rows, in_f + 2*rows + 3)
    tn, padded_n = _choose_tile(n, max_tile_n, min_grid_steps)

    x_p = x_fm.astype(jnp.float32)
    if padded_n != n:
        x_p = jnp.pad(x_p, ((0, 0), (0, padded_n - n)))

    kernel = _make_blob_kernel(in_f, rows, out_f)
    grid = (padded_n // tn,)

    # Advisory cost so XLA schedules surrounding ops sensibly (VALU-bound:
    # ~2*rows*(in_f + 2*rows) mul/adds per column, ~(in_f+out_f)*4 B/column).
    cost = pl.CostEstimate(
        flops=2 * rows * (in_f + 2 * rows + 3) * int(padded_n),
        transcendentals=0,
        bytes_accessed=(in_f + out_f) * 4 * int(padded_n) + int(packed.size) * 4,
    )

    out_fm = pl.pallas_call(
        kernel,
        out_shape=jax.ShapeDtypeStruct((out_f, padded_n), jnp.float32),
        grid_spec=pltpu.PrefetchScalarGridSpec(
            num_scalar_prefetch=0,
            grid=grid,
            in_specs=[
                # packed params: constant block index -> DMA'd once, resident.
                pl.BlockSpec(packed.shape, lambda i: (0, 0)),
                # activations: batch tiles along the lane axis.
                pl.BlockSpec((in_f, tn), lambda i: (0, i)),
            ],
            out_specs=pl.BlockSpec((out_f, tn), lambda i: (0, i)),
        ),
        compiler_params=pltpu.CompilerParams(
            # batch tiles are independent -> megacore-shardable on v7x
            dimension_semantics=("parallel",),
            # large tiles exceed v5e's 16 MiB scoped-VMEM default; 48 MiB is
            # safely below every generation's physical VMEM (v7x: 64 MiB/TC).
            vmem_limit_bytes=48 * 1024 * 1024,
        ),
        cost_estimate=cost,
    )(packed, x_p)

    if padded_n != n:
        out_fm = out_fm[:, :n]
    return out_fm


def blob_model_forward(x, params, *, max_tile_n=65536, min_grid_steps=4):
    """PyTorch-layout compatibility wrapper: x (N, in_f) -> (N, out_f).

    The two .T copies here are exactly the wrapper HBM traffic the
    feature-major API avoids; prefer blob_model_forward_fm when the caller
    controls the layout.
    """
    out_fm = blob_model_forward_fm(
        x.T, params, max_tile_n=max_tile_n, min_grid_steps=min_grid_steps)
    return out_fm.T


# ----------------------------------------------------------------------------
# init & reference
# ----------------------------------------------------------------------------
def init_params(key, input_size=2, hidden_size=8, output_size=4):
    """Deterministic init mimicking PyTorch Linear's U(-1/sqrt(fan_in), ...).

    Weights in PyTorch layout (out_features, in_features), biases (out_features,).
    """
    dims = [(input_size, hidden_size),
            (hidden_size, hidden_size),
            (hidden_size, output_size)]
    params = []
    for (fan_in, fan_out) in dims:
        key, kw, kb = jax.random.split(key, 3)
        bound = 1.0 / jnp.sqrt(jnp.float32(fan_in))
        w = jax.random.uniform(kw, (fan_out, fan_in), jnp.float32,
                               minval=-bound, maxval=bound)
        b = jax.random.uniform(kb, (fan_out,), jnp.float32,
                               minval=-bound, maxval=bound)
        params += [w, b]
    return tuple(params)


def reference_forward(x, params):
    """Pure-JAX reference of the same forward pass (PyTorch-layout weights)."""
    w1, b1, w2, b2, w3, b3 = params
    h = jnp.maximum(x @ w1.T + b1, 0.0)
    h = jnp.maximum(h @ w2.T + b2, 0.0)
    return h @ w3.T + b3


if __name__ == "__main__":
    key = jax.random.PRNGKey(0)
    key_x, key_x2, key_p = jax.random.split(key, 3)

    input_size, hidden_size, output_size = 2, 8, 4
    params = init_params(key_p, input_size, hidden_size, output_size)

    # 1) Small PyTorch-layout batch (matches the nn.Module spec).
    batch = 8
    x = jax.random.normal(key_x, (batch, input_size), jnp.float32)
    logits = jax.block_until_ready(blob_model_forward(x, params))
    ref = reference_forward(x, params)
    assert logits.shape == (batch, output_size)
    assert jnp.allclose(logits, ref, atol=1e-5, rtol=1e-5), "mismatch vs reference"

    # 2) Feature-major zero-copy path with a multi-step grid (384 cols -> 3 steps).
    n2 = 384
    x_fm = jax.random.normal(key_x2, (input_size, n2), jnp.float32)
    out_fm = jax.block_until_ready(blob_model_forward_fm(x_fm, params))
    ref2 = reference_forward(x_fm.T, params)
    assert out_fm.shape == (output_size, n2)
    assert jnp.allclose(out_fm.T, ref2, atol=1e-5, rtol=1e-5), "mismatch vs reference (fm)"

    print("KERNEL_OK")
</pallas_src>

<mosaic_0001>
module attributes {stable_mosaic.version = 11 : i64} {
  func.func @kernel(%arg0: i32, %arg1: memref<8x21xf32, #tpu.memory_space<vmem>>, %arg2: memref<2x128xf32, #tpu.memory_space<vmem>>, %arg3: memref<4x128xf32, #tpu.memory_space<vmem>>) attributes {dimension_semantics = [#tpu.dimension_semantics<parallel>], iteration_bounds = array<i64: 1>, scalar_prefetch = 0 : i64, scratch_operands = 0 : i64, tpu.core_type = #tpu.core_type<tc>, window_params = [{pipeline_mode = #tpu.pipeline_mode<synchronous>, transform_indices = @transform_0, window_bounds = array<i64: 8, 21>}, {transform_indices = @transform_1, window_bounds = array<i64: 2, 128>}, {transform_indices = @transform_2, window_bounds = array<i64: 4, 128>}]} {
    %c0 = arith.constant 0 : index
    %c0_0 = arith.constant 0 : index
    %0 = vector.load %arg1[%c0, %c0_0] : memref<8x21xf32, #tpu.memory_space<vmem>>, vector<8x21xf32>
    %c0_1 = arith.constant 0 : index
    %c0_2 = arith.constant 0 : index
    %1 = vector.load %arg2[%c0_1, %c0_2] : memref<2x128xf32, #tpu.memory_space<vmem>>, vector<2x128xf32>
    %2 = vector.extract_strided_slice %0 {offsets = [0, 0], sizes = [8, 1], strides = [1, 1]} : vector<8x21xf32> to vector<8x1xf32>
    %3 = vector.extract_strided_slice %1 {offsets = [0, 0], sizes = [1, 128], strides = [1, 1]} : vector<2x128xf32> to vector<1x128xf32>
    %4 = vector.broadcast %2 : vector<8x1xf32> to vector<8x128xf32>
    %5 = vector.broadcast %3 : vector<1x128xf32> to vector<8x128xf32>
    %6 = arith.mulf %4, %5 : vector<8x128xf32>
    %7 = vector.extract_strided_slice %0 {offsets = [0, 1], sizes = [8, 1], strides = [1, 1]} : vector<8x21xf32> to vector<8x1xf32>
    %8 = vector.extract_strided_slice %1 {offsets = [1, 0], sizes = [1, 128], strides = [1, 1]} : vector<2x128xf32> to vector<1x128xf32>
    %9 = vector.broadcast %7 : vector<8x1xf32> to vector<8x128xf32>
    %10 = vector.broadcast %8 : vector<1x128xf32> to vector<8x128xf32>
    %11 = arith.mulf %9, %10 : vector<8x128xf32>
    %12 = arith.addf %6, %11 : vector<8x128xf32>
    %13 = vector.extract_strided_slice %0 {offsets = [0, 2], sizes = [8, 1], strides = [1, 1]} : vector<8x21xf32> to vector<8x1xf32>
    %14 = vector.broadcast %13 : vector<8x1xf32> to vector<8x128xf32>
    %15 = arith.addf %12, %14 : vector<8x128xf32>
    %cst = arith.constant 0.000000e+00 : f32
    %16 = vector.broadcast %cst : f32 to vector<8x128xf32>
    %17 = arith.maximumf %15, %16 : vector<8x128xf32>
    %18 = vector.extract_strided_slice %0 {offsets = [0, 3], sizes = [8, 1], strides = [1, 1]} : vector<8x21xf32> to vector<8x1xf32>
    %19 = vector.extract_strided_slice %17 {offsets = [0, 0], sizes = [1, 128], strides = [1, 1]} : vector<8x128xf32> to vector<1x128xf32>
    %20 = vector.broadcast %18 : vector<8x1xf32> to vector<8x128xf32>
    %21 = vector.broadcast %19 : vector<1x128xf32> to vector<8x128xf32>
    %22 = arith.mulf %20, %21 : vector<8x128xf32>
    %23 = vector.extract_strided_slice %0 {offsets = [0, 4], sizes = [8, 1], strides = [1, 1]} : vector<8x21xf32> to vector<8x1xf32>
    %24 = vector.extract_strided_slice %17 {offsets = [1, 0], sizes = [1, 128], strides = [1, 1]} : vector<8x128xf32> to vector<1x128xf32>
    %25 = vector.broadcast %23 : vector<8x1xf32> to vector<8x128xf32>
    %26 = vector.broadcast %24 : vector<1x128xf32> to vector<8x128xf32>
    %27 = arith.mulf %25, %26 : vector<8x128xf32>
    %28 = arith.addf %22, %27 : vector<8x128xf32>
    %29 = vector.extract_strided_slice %0 {offsets = [0, 5], sizes = [8, 1], strides = [1, 1]} : vector<8x21xf32> to vector<8x1xf32>
    %30 = vector.extract_strided_slice %17 {offsets = [2, 0], sizes = [1, 128], strides = [1, 1]} : vector<8x128xf32> to vector<1x128xf32>
    %31 = vector.broadcast %29 : vector<8x1xf32> to vector<8x128xf32>
    %32 = vector.broadcast %30 : vector<1x128xf32> to vector<8x128xf32>
    %33 = arith.mulf %31, %32 : vector<8x128xf32>
    %34 = arith.addf %28, %33 : vector<8x128xf32>
    %35 = vector.extract_strided_slice %0 {offsets = [0, 6], sizes = [8, 1], strides = [1, 1]} : vector<8x21xf32> to vector<8x1xf32>
    %36 = vector.extract_strided_slice %17 {offsets = [3, 0], sizes = [1, 128], strides = [1, 1]} : vector<8x128xf32> to vector<1x128xf32>
    %37 = vector.broadcast %35 : vector<8x1xf32> to vector<8x128xf32>
    %38 = vector.broadcast %36 : vector<1x128xf32> to vector<8x128xf32>
    %39 = arith.mulf %37, %38 : vector<8x128xf32>
    %40 = arith.addf %34, %39 : vector<8x128xf32>
    %41 = vector.extract_strided_slice %0 {offsets = [0, 7], sizes = [8, 1], strides = [1, 1]} : vector<8x21xf32> to vector<8x1xf32>
    %42 = vector.extract_strided_slice %17 {offsets = [4, 0], sizes = [1, 128], strides = [1, 1]} : vector<8x128xf32> to vector<1x128xf32>
    %43 = vector.broadcast %41 : vector<8x1xf32> to vector<8x128xf32>
    %44 = vector.broadcast %42 : vector<1x128xf32> to vector<8x128xf32>
    %45 = arith.mulf %43, %44 : vector<8x128xf32>
    %46 = arith.addf %40, %45 : vector<8x128xf32>
    %47 = vector.extract_strided_slice %0 {offsets = [0, 8], sizes = [8, 1], strides = [1, 1]} : vector<8x21xf32> to vector<8x1xf32>
    %48 = vector.extract_strided_slice %17 {offsets = [5, 0], sizes = [1, 128], strides = [1, 1]} : vector<8x128xf32> to vector<1x128xf32>
    %49 = vector.broadcast %47 : vector<8x1xf32> to vector<8x128xf32>
    %50 = vector.broadcast %48 : vector<1x128xf32> to vector<8x128xf32>
    %51 = arith.mulf %49, %50 : vector<8x128xf32>
    %52 = arith.addf %46, %51 : vector<8x128xf32>
    %53 = vector.extract_strided_slice %0 {offsets = [0, 9], sizes = [8, 1], strides = [1, 1]} : vector<8x21xf32> to vector<8x1xf32>
    %54 = vector.extract_strided_slice %17 {offsets = [6, 0], sizes = [1, 128], strides = [1, 1]} : vector<8x128xf32> to vector<1x128xf32>
    %55 = vector.broadcast %53 : vector<8x1xf32> to vector<8x128xf32>
    %56 = vector.broadcast %54 : vector<1x128xf32> to vector<8x128xf32>
    %57 = arith.mulf %55, %56 : vector<8x128xf32>
    %58 = arith.addf %52, %57 : vector<8x128xf32>
    %59 = vector.extract_strided_slice %0 {offsets = [0, 10], sizes = [8, 1], strides = [1, 1]} : vector<8x21xf32> to vector<8x1xf32>
    %60 = vector.extract_strided_slice %17 {offsets = [7, 0], sizes = [1, 128], strides = [1, 1]} : vector<8x128xf32> to vector<1x128xf32>
    %61 = vector.broadcast %59 : vector<8x1xf32> to vector<8x128xf32>
    %62 = vector.broadcast %60 : vector<1x128xf32> to vector<8x128xf32>
    %63 = arith.mulf %61, %62 : vector<8x128xf32>
    %64 = arith.addf %58, %63 : vector<8x128xf32>
    %65 = vector.extract_strided_slice %0 {offsets = [0, 11], sizes = [8, 1], strides = [1, 1]} : vector<8x21xf32> to vector<8x1xf32>
    %66 = vector.broadcast %65 : vector<8x1xf32> to vector<8x128xf32>
    %67 = arith.addf %64, %66 : vector<8x128xf32>
    %cst_3 = arith.constant 0.000000e+00 : f32
    %68 = vector.broadcast %cst_3 : f32 to vector<8x128xf32>
    %69 = arith.maximumf %67, %68 : vector<8x128xf32>
    %70 = vector.extract_strided_slice %0 {offsets = [0, 12], sizes = [8, 1], strides = [1, 1]} : vector<8x21xf32> to vector<8x1xf32>
    %71 = vector.extract_strided_slice %69 {offsets = [0, 0], sizes = [1, 128], strides = [1, 1]} : vector<8x128xf32> to vector<1x128xf32>
    %72 = vector.broadcast %70 : vector<8x1xf32> to vector<8x128xf32>
    %73 = vector.broadcast %71 : vector<1x128xf32> to vector<8x128xf32>
    %74 = arith.mulf %72, %73 : vector<8x128xf32>
    %75 = vector.extract_strided_slice %0 {offsets = [0, 13], sizes = [8, 1], strides = [1, 1]} : vector<8x21xf32> to vector<8x1xf32>
    %76 = vector.extract_strided_slice %69 {offsets = [1, 0], sizes = [1, 128], strides = [1, 1]} : vector<8x128xf32> to vector<1x128xf32>
    %77 = vector.broadcast %75 : vector<8x1xf32> to vector<8x128xf32>
    %78 = vector.broadcast %76 : vector<1x128xf32> to vector<8x128xf32>
    %79 = arith.mulf %77, %78 : vector<8x128xf32>
    %80 = arith.addf %74, %79 : vector<8x128xf32>
    %81 = vector.extract_strided_slice %0 {offsets = [0, 14], sizes = [8, 1], strides = [1, 1]} : vector<8x21xf32> to vector<8x1xf32>
    %82 = vector.extract_strided_slice %69 {offsets = [2, 0], sizes = [1, 128], strides = [1, 1]} : vector<8x128xf32> to vector<1x128xf32>
    %83 = vector.broadcast %81 : vector<8x1xf32> to vector<8x128xf32>
    %84 = vector.broadcast %82 : vector<1x128xf32> to vector<8x128xf32>
    %85 = arith.mulf %83, %84 : vector<8x128xf32>
    %86 = arith.addf %80, %85 : vector<8x128xf32>
    %87 = vector.extract_strided_slice %0 {offsets = [0, 15], sizes = [8, 1], strides = [1, 1]} : vector<8x21xf32> to vector<8x1xf32>
    %88 = vector.extract_strided_slice %69 {offsets = [3, 0], sizes = [1, 128], strides = [1, 1]} : vector<8x128xf32> to vector<1x128xf32>
    %89 = vector.broadcast %87 : vector<8x1xf32> to vector<8x128xf32>
    %90 = vector.broadcast %88 : vector<1x128xf32> to vector<8x128xf32>
    %91 = arith.mulf %89, %90 : vector<8x128xf32>
    %92 = arith.addf %86, %91 : vector<8x128xf32>
    %93 = vector.extract_strided_slice %0 {offsets = [0, 16], sizes = [8, 1], strides = [1, 1]} : vector<8x21xf32> to vector<8x1xf32>
    %94 = vector.extract_strided_slice %69 {offsets = [4, 0], sizes = [1, 128], strides = [1, 1]} : vector<8x128xf32> to vector<1x128xf32>
    %95 = vector.broadcast %93 : vector<8x1xf32> to vector<8x128xf32>
    %96 = vector.broadcast %94 : vector<1x128xf32> to vector<8x128xf32>
    %97 = arith.mulf %95, %96 : vector<8x128xf32>
    %98 = arith.addf %92, %97 : vector<8x128xf32>
    %99 = vector.extract_strided_slice %0 {offsets = [0, 17], sizes = [8, 1], strides = [1, 1]} : vector<8x21xf32> to vector<8x1xf32>
    %100 = vector.extract_strided_slice %69 {offsets = [5, 0], sizes = [1, 128], strides = [1, 1]} : vector<8x128xf32> to vector<1x128xf32>
    %101 = vector.broadcast %99 : vector<8x1xf32> to vector<8x128xf32>
    %102 = vector.broadcast %100 : vector<1x128xf32> to vector<8x128xf32>
    %103 = arith.mulf %101, %102 : vector<8x128xf32>
    %104 = arith.addf %98, %103 : vector<8x128xf32>
    %105 = vector.extract_strided_slice %0 {offsets = [0, 18], sizes = [8, 1], strides = [1, 1]} : vector<8x21xf32> to vector<8x1xf32>
    %106 = vector.extract_strided_slice %69 {offsets = [6, 0], sizes = [1, 128], strides = [1, 1]} : vector<8x128xf32> to vector<1x128xf32>
    %107 = vector.broadcast %105 : vector<8x1xf32> to vector<8x128xf32>
    %108 = vector.broadcast %106 : vector<1x128xf32> to vector<8x128xf32>
    %109 = arith.mulf %107, %108 : vector<8x128xf32>
    %110 = arith.addf %104, %109 : vector<8x128xf32>
    %111 = vector.extract_strided_slice %0 {offsets = [0, 19], sizes = [8, 1], strides = [1, 1]} : vector<8x21xf32> to vector<8x1xf32>
    %112 = vector.extract_strided_slice %69 {offsets = [7, 0], sizes = [1, 128], strides = [1, 1]} : vector<8x128xf32> to vector<1x128xf32>
    %113 = vector.broadcast %111 : vector<8x1xf32> to vector<8x128xf32>
    %114 = vector.broadcast %112 : vector<1x128xf32> to vector<8x128xf32>
    %115 = arith.mulf %113, %114 : vector<8x128xf32>
    %116 = arith.addf %110, %115 : vector<8x128xf32>
    %117 = vector.extract_strided_slice %0 {offsets = [0, 20], sizes = [8, 1], strides = [1, 1]} : vector<8x21xf32> to vector<8x1xf32>
    %118 = vector.broadcast %117 : vector<8x1xf32> to vector<8x128xf32>
    %119 = arith.addf %116, %118 : vector<8x128xf32>
    %120 = vector.extract_strided_slice %119 {offsets = [0, 0], sizes = [4, 128], strides = [1, 1]} : vector<8x128xf32> to vector<4x128xf32>
    %c0_4 = arith.constant 0 : index
    %c0_5 = arith.constant 0 : index
    %121 = vector.load %arg3[%c0_4, %c0_5] : memref<4x128xf32, #tpu.memory_space<vmem>>, vector<4x128xf32>
    tpu.vector_store %arg3[%c0_4, %c0_5], %120 {strides = array<i32>} : memref<4x128xf32, #tpu.memory_space<vmem>>, vector<4x128xf32>,
    return
  }
  func.func @transform_0(%arg0: i32) -> (i32, i32) {
    %c0_i32 = arith.constant 0 : i32
    %c0_i32_0 = arith.constant 0 : i32
    %c0_i32_1 = arith.constant 0 : i32
    return %c0_i32, %c0_i32_0 : i32, i32
  }
  func.func @transform_1(%arg0: i32) -> (i32, i32) {
    %c0_i32 = arith.constant 0 : i32
    %c0_i32_0 = arith.constant 0 : i32
    return %c0_i32, %arg0 : i32, i32
  }
  func.func @transform_2(%arg0: i32) -> (i32, i32) {
    %c0_i32 = arith.constant 0 : i32
    %c0_i32_0 = arith.constant 0 : i32
    return %c0_i32, %arg0 : i32, i32
  }
}

</mosaic_0001>

<llo_original>
// kernel: tpu_custom_call.1
$region0: #{tpu_custom_call.1}
  #allocation0 [shape = 'u32[]', space=smem, size = 0x4, offset = 0x4, fixed_abs, tag = 'smem constant byte address 0x4 - core index']
  #allocation1 [shape = 'u32[144,128]{1,0:T(1,128)}', space=vmem, size = 0x12000, scoped, tag = 'internal scratch']
  %s0 = inlined_call_operand.hbm [shape: f32[8,21], index: 0, kind: input, shape index: {}]
  %s1 = inlined_call_operand.vmem [shape: f32[2,128], index: 1, kind: input, shape index: {}]
  %s2 = inlined_call_operand.hbm [shape: f32[4,128], index: 2, kind: output, shape index: {}]
  %s3 = sld [smem:[#allocation0]]
  $region22: #{tpu_custom_call.1} parent=0
    _
  %s5 = ssub.s32 1, %s3
  %s6 = scalar_select 0, %s5, %s3
  $region1: #{tpu_custom_call.1} parent=0
    #allocation2 [shape = 'u8[4096]{0}', space=vmem, size = 0x1000, scoped, tag = 'input window, operand 0, single buffered']
    #allocation3 [shape = 's32[1]{0}', space=sflag, size = 0x4, scoped, tag = 'scoped memory for tpu_custom_call.1']
    #allocation4 [shape = 's32[1]{0}', space=sflag, size = 0x4, scoped, tag = 'scoped memory for tpu_custom_call.1']
    #allocation5 [shape = 'u8[2048]{0}', space=vmem, size = 0x800, scoped, tag = 'output window, operand 0, single buffered']
    %7 = vsyncpa [#allocation3], 0
    %8 = vsyncpa [#allocation4], 0
    // Predicated region
    $region2: #{tpu_custom_call.1} parent=1 // pred_check
      _
    $region3: #{tpu_custom_call.1} parent=1 // pred_check_branch
      %10 = sbr.rel (0) target = $region5
    $region4: #{tpu_custom_call.1} parent=1 // pred_region
      %s12 = ssub.s32 128, 128
      %13 = vsyncadd [#allocation3], %s12
      %s15 = sshll.u32 [#allocation2], 4
      %s16 = int_to_ptr.vmem [resolvable:$true] %s15
      %18 = dma.hbm_to_vmem [thread:$0]  %s0, 128, %s16, [#allocation3]
    $region5: #{tpu_custom_call.1} parent=1 // pred_fallthru
      _
    // Predicated region
    $region6: #{tpu_custom_call.1} parent=1 // pred_check
      _
    $region7: #{tpu_custom_call.1} parent=1 // pred_check_branch
      %20 = sbr.rel (0) target = $region9
    $region8: #{tpu_custom_call.1} parent=1 // pred_region
      _
    $region9: #{tpu_custom_call.1} parent=1 // pred_fallthru
      _
    // Predicated region
    $region10: #{tpu_custom_call.1} parent=1 // pred_check
      _
    $region11: #{tpu_custom_call.1} parent=1 // pred_check_branch
      %22 = sbr.rel (0) target = $region13
    $region12: #{tpu_custom_call.1} parent=1 // pred_region
      %23 = dma.done [#allocation3], 128
    $region13: #{tpu_custom_call.1} parent=1 // pred_fallthru
      _
    %v24 = vld [vmem:[#allocation2] sm:$0xff]
    %v25 = vld [vmem:[%s1] sm:$0x3]
    %27 = vset.pattern.permute.xlu0 0
    %28 = vperm.xlu0 %27, %v24
    %v29 = vpop.permute.xlu0 %28
    %v31 = vlaneseq
    %v32 = vshrl.u32 %v31, 7
    %v33 = vsub.s32 0, %v32
    %v34 = vrot.slane %v25, %v33
    %v35 = vmul.f32 %v29, %v34
    %36 = vset.pattern.permute.xlu0 1
    %37 = vperm.xlu0 %36, %v24
    %v38 = vpop.permute.xlu0 %37
    %v40 = vlaneseq
    %v41 = vshrl.u32 %v40, 7
    %v42 = vsub.s32 1, %v41
    %v43 = vrot.slane %v25, %v42
    %v44 = vmul.f32 %v38, %v43
    %v45 = vadd.f32 %v35, %v44
    %46 = vset.pattern.permute.xlu0 2
    %47 = vperm.xlu0 %46, %v24
    %v48 = vpop.permute.xlu0 %47
    %v50 = vadd.f32 %v45, %v48
    %v51 = vmax.f32 %v50, 0.0
    %52 = vset.pattern.permute.xlu0 3
    %53 = vperm.xlu0 %52, %v24
    %v54 = vpop.permute.xlu0 %53
    %v56 = vlaneseq
    %v57 = vshrl.u32 %v56, 7
    %v58 = vsub.s32 0, %v57
    %v59 = vrot.slane %v51, %v58
    %v60 = vmul.f32 %v54, %v59
    %61 = vset.pattern.permute.xlu0 4
    %62 = vperm.xlu0 %61, %v24
    %v63 = vpop.permute.xlu0 %62
    %v65 = vlaneseq
    %v66 = vshrl.u32 %v65, 7
    %v67 = vsub.s32 1, %v66
    %v68 = vrot.slane %v51, %v67
    %v69 = vmul.f32 %v63, %v68
    %v70 = vadd.f32 %v60, %v69
    %71 = vset.pattern.permute.xlu0 5
    %72 = vperm.xlu0 %71, %v24
    %v73 = vpop.permute.xlu0 %72
    %v75 = vlaneseq
    %v76 = vshrl.u32 %v75, 7
    %v77 = vsub.s32 2, %v76
    %v78 = vrot.slane %v51, %v77
    %v79 = vmul.f32 %v73, %v78
    %v80 = vadd.f32 %v70, %v79
    %81 = vset.pattern.permute.xlu0 6
    %82 = vperm.xlu0 %81, %v24
    %v83 = vpop.permute.xlu0 %82
    %v85 = vlaneseq
    %v86 = vshrl.u32 %v85, 7
    %v87 = vsub.s32 3, %v86
    %v88 = vrot.slane %v51, %v87
    %v89 = vmul.f32 %v83, %v88
    %v90 = vadd.f32 %v80, %v89
    %91 = vset.pattern.permute.xlu0 7
    %92 = vperm.xlu0 %91, %v24
    %v93 = vpop.permute.xlu0 %92
    %v95 = vlaneseq
    %v96 = vshrl.u32 %v95, 7
    %v97 = vsub.s32 4, %v96
    %v98 = vrot.slane %v51, %v97
    %v99 = vmul.f32 %v93, %v98
    %v100 = vadd.f32 %v90, %v99
    %101 = vset.pattern.permute.xlu0 8
    %102 = vperm.xlu0 %101, %v24
    %v103 = vpop.permute.xlu0 %102
    %v105 = vlaneseq
    %v106 = vshrl.u32 %v105, 7
    %v107 = vsub.s32 5, %v106
    %v108 = vrot.slane %v51, %v107
    %v109 = vmul.f32 %v103, %v108
    %v110 = vadd.f32 %v100, %v109
    %111 = vset.pattern.permute.xlu0 9
    %112 = vperm.xlu0 %111, %v24
    %v113 = vpop.permute.xlu0 %112
    %v115 = vlaneseq
    %v116 = vshrl.u32 %v115, 7
    %v117 = vsub.s32 6, %v116
    %v118 = vrot.slane %v51, %v117
    %v119 = vmul.f32 %v113, %v118
    %v120 = vadd.f32 %v110, %v119
    %121 = vset.pattern.permute.xlu0 10
    %122 = vperm.xlu0 %121, %v24
    %v123 = vpop.permute.xlu0 %122
    %v125 = vlaneseq
    %v126 = vshrl.u32 %v125, 7
    %v127 = vsub.s32 7, %v126
    %v128 = vrot.slane %v51, %v127
    %v129 = vmul.f32 %v123, %v128
    %v130 = vadd.f32 %v120, %v129
    %131 = vset.pattern.permute.xlu0 11
    %132 = vperm.xlu0 %131, %v24
    %v133 = vpop.permute.xlu0 %132
    %v135 = vadd.f32 %v130, %v133
    %v136 = vmax.f32 %v135, 0.0
    %137 = vset.pattern.permute.xlu0 12
    %138 = vperm.xlu0 %137, %v24
    %v139 = vpop.permute.xlu0 %138
    %v141 = vlaneseq
    %v142 = vshrl.u32 %v141, 7
    %v143 = vsub.s32 0, %v142
    %v144 = vrot.slane %v136, %v143
    %v145 = vmul.f32 %v139, %v144
    %146 = vset.pattern.permute.xlu0 13
    %147 = vperm.xlu0 %146, %v24
    %v148 = vpop.permute.xlu0 %147
    %v150 = vlaneseq
    %v151 = vshrl.u32 %v150, 7
    %v152 = vsub.s32 1, %v151
    %v153 = vrot.slane %v136, %v152
    %v154 = vmul.f32 %v148, %v153
    %v155 = vadd.f32 %v145, %v154
    %156 = vset.pattern.permute.xlu0 14
    %157 = vperm.xlu0 %156, %v24
    %v158 = vpop.permute.xlu0 %157
    %v160 = vlaneseq
    %v161 = vshrl.u32 %v160, 7
    %v162 = vsub.s32 2, %v161
    %v163 = vrot.slane %v136, %v162
    %v164 = vmul.f32 %v158, %v163
    %v165 = vadd.f32 %v155, %v164
    %166 = vset.pattern.permute.xlu0 15
    %167 = vperm.xlu0 %166, %v24
    %v168 = vpop.permute.xlu0 %167
    %v170 = vlaneseq
    %v171 = vshrl.u32 %v170, 7
    %v172 = vsub.s32 3, %v171
    %v173 = vrot.slane %v136, %v172
    %v174 = vmul.f32 %v168, %v173
    %v175 = vadd.f32 %v165, %v174
    %176 = vset.pattern.permute.xlu0 16
    %177 = vperm.xlu0 %176, %v24
    %v178 = vpop.permute.xlu0 %177
    %v180 = vlaneseq
    %v181 = vshrl.u32 %v180, 7
    %v182 = vsub.s32 4, %v181
    %v183 = vrot.slane %v136, %v182
    %v184 = vmul.f32 %v178, %v183
    %v185 = vadd.f32 %v175, %v184
    %186 = vset.pattern.permute.xlu0 17
    %187 = vperm.xlu0 %186, %v24
    %v188 = vpop.permute.xlu0 %187
    %v190 = vlaneseq
    %v191 = vshrl.u32 %v190, 7
    %v192 = vsub.s32 5, %v191
    %v193 = vrot.slane %v136, %v192
    %v194 = vmul.f32 %v188, %v193
    %v195 = vadd.f32 %v185, %v194
    %196 = vset.pattern.permute.xlu0 18
    %197 = vperm.xlu0 %196, %v24
    %v198 = vpop.permute.xlu0 %197
    %v200 = vlaneseq
    %v201 = vshrl.u32 %v200, 7
    %v202 = vsub.s32 6, %v201
    %v203 = vrot.slane %v136, %v202
    %v204 = vmul.f32 %v198, %v203
    %v205 = vadd.f32 %v195, %v204
    %206 = vset.pattern.permute.xlu0 19
    %207 = vperm.xlu0 %206, %v24
    %v208 = vpop.permute.xlu0 %207
    %v210 = vlaneseq
    %v211 = vshrl.u32 %v210, 7
    %v212 = vsub.s32 7, %v211
    %v213 = vrot.slane %v136, %v212
    %v214 = vmul.f32 %v208, %v213
    %v215 = vadd.f32 %v205, %v214
    %216 = vset.pattern.permute.xlu0 20
    %217 = vperm.xlu0 %216, %v24
    %v218 = vpop.permute.xlu0 %217
    %v220 = vadd.f32 %v215, %v218
    %221 = vst [vmem:[#allocation5] sm:$0xf] %v220
    // Predicated region
    $region14: #{tpu_custom_call.1} parent=1 // pred_check
      _
    $region15: #{tpu_custom_call.1} parent=1 // pred_check_branch
      %223 = sbr.rel (0) target = $region17
    $region16: #{tpu_custom_call.1} parent=1 // pred_region
      %s225 = ssub.s32 64, 64
      %226 = vsyncadd [#allocation4], %s225
      %s228 = sshll.u32 [#allocation5], 4
      %s229 = int_to_ptr.vmem [resolvable:$true] %s228
      %231 = dma.vmem_to_hbm [thread:$0]  %s229, 64, %s2, [#allocation4]
    $region17: #{tpu_custom_call.1} parent=1 // pred_fallthru
      _
    // Predicated region
    $region18: #{tpu_custom_call.1} parent=1 // pred_check
      _
    $region19: #{tpu_custom_call.1} parent=1 // pred_check_branch
      %233 = sbr.rel (0) target = $region21
    $region20: #{tpu_custom_call.1} parent=1 // pred_region
      %234 = dma.done [#allocation4], 64
    $region21: #{tpu_custom_call.1} parent=1 // pred_fallthru
      _
    %235 = vsyncpa [#allocation3], 1
    %236 = vsyncpa [#allocation4], 1

</llo_original>
